<compile_context>
chip_gen: v5e
topology: v5e:2x2
jax: 0.10.0
libtpu: 0.0.40
codegen_flags: <defaults>
</compile_context>

<pallas_src>
import jax
import jax.numpy as jnp
from jax import lax
from jax.experimental import pallas as pl
from jax.experimental.pallas import tpu as pltpu

ALPHA = 0.2          # LeakyReLU negative slope
BN_EPS = 1e-5        # nn.BatchNorm1d default eps
NEG_BIG = -9e15      # mask value used by the PyTorch module
LANE = 128


def _round_up(x, m):
    return ((x + m - 1) // m) * m


def gat_conv_kernel(x_ref, wext_ref, adj_ref, adjd_ref, bias_ref,
                    hp_ref, stats_ref):
    """Per-batch GATConv (fused projection + masked softmax attention + bias).

    Also emits per-batch BatchNorm partial statistics (sum, sum-of-squares)."""
    cpad = hp_ref.shape[-1]

    x2 = x_ref[0]                                    # (N, Cin)
    wext = wext_ref[...]                             # (Cin, 2*cpad + LANE)
    adj = adj_ref[...]                               # (N, N)
    adj_d = adjd_ref[...]                            # (N, 1)  diag of adj
    bias = bias_ref[...]                             # (1, cpad)

    # Single wide MXU pass; columns = [W0+W1 | W0-W1 | (W0+W1)@a1 | (W0+W1)@a2 | 0-pad].
    xe = jnp.dot(x2, wext, preferred_element_type=jnp.float32)   # (N, 2*cpad+LANE)
    h = xe[:, :cpad]                                 # h0 + h1
    hdiff = xe[:, cpad:2 * cpad]                     # h0 - h1
    s12 = xe[:, 2 * cpad:2 * cpad + 2]               # (N, 2): [a1.h , a2.h]

    s1 = s12[:, 0:1]                                 # (N, 1)
    s2_row = jnp.transpose(s12[:, 1:2])              # (1, N) — single tiny relayout

    # attention logits + LeakyReLU + adjacency mask
    e = s1 + s2_row                                  # (N, N)
    e = jnp.where(e > 0, e, ALPHA * e)
    masked = jnp.where(adj > 0, e, jnp.float32(NEG_BIG))

    m = jnp.max(masked, axis=1, keepdims=True)       # (N, 1)
    p = jnp.exp(masked - m)                          # unnormalized attention
    inv_den = pl.reciprocal(jnp.sum(p, axis=1, keepdims=True), approx=True)

    # diag(att) analytically (no NxN eye, no extra cross-lane reduce):
    #   e_ii = lrelu(s1_i + s2_i), masked by adj diagonal, same row max m.
    e_d = s1 + s12[:, 1:2]
    e_d = jnp.where(e_d > 0, e_d, ALPHA * e_d)
    e_d = jnp.where(adj_d > 0, e_d, jnp.float32(NEG_BIG))
    p_diag = jnp.exp(e_d - m)                        # (N, 1) == diag of p

    # (att*I) @ h0 + (att*(1-I)) @ h1  ==  att @ h1 + diag(att) * (h0 - h1)
    h1 = 0.5 * (h - hdiff)
    agg = jnp.dot(p, h1, preferred_element_type=jnp.float32) + p_diag * hdiff
    h_prime = agg * inv_den + bias                   # (N, cpad)  lane-dense

    hp_ref[...] = h_prime
    ssum = jnp.sum(h_prime, axis=0, keepdims=True)           # (1, cpad)
    ssq = jnp.sum(h_prime * h_prime, axis=0, keepdims=True)  # (1, cpad)
    stats_ref[0] = jnp.concatenate([ssum, ssq], axis=0)      # (2, cpad)


def bn_relu_kernel(hp_ref, ss_ref, out_ref):
    """Apply precomputed BatchNorm scale/shift + ReLU on a lane-dense row slab."""
    scale = ss_ref[0:1, :]                           # (1, cpad)
    shift = ss_ref[1:2, :]                           # (1, cpad)
    out_ref[...] = jnp.maximum(hp_ref[...] * scale + shift, 0.0)


def gat_block(x, W, a, adj, bias, gamma, beta):
    """x: (B, N, Cin); W: (2, Cin, Cout); a: (2*Cout, 1); adj: (N, N);
    bias/gamma/beta: (1, Cout).  Returns (B, N, Cout) float32."""
    x = x.astype(jnp.float32)
    B, N, Cin = x.shape
    Cout = W.shape[2]
    C_pad = _round_up(Cout, LANE)
    C_ext = 2 * C_pad + LANE

    # ---- parameter glue (plain JAX, outside the hot path) ----
    w0 = W[0].astype(jnp.float32)
    w1 = W[1].astype(jnp.float32)
    w_sum = w0 + w1                                   # (Cin, Cout)
    w_diff = w0 - w1
    a1 = a[:Cout, 0].astype(jnp.float32)              # (Cout,)
    a2 = a[Cout:, 0].astype(jnp.float32)
    wa1 = w_sum @ a1                                  # (Cin,)
    wa2 = w_sum @ a2

    w_ext = jnp.zeros((Cin, C_ext), jnp.float32)
    w_ext = w_ext.at[:, :Cout].set(w_sum)
    w_ext = w_ext.at[:, C_pad:C_pad + Cout].set(w_diff)
    w_ext = w_ext.at[:, 2 * C_pad].set(wa1)
    w_ext = w_ext.at[:, 2 * C_pad + 1].set(wa2)

    bias_p = jnp.zeros((1, C_pad), jnp.float32).at[:, :Cout].set(
        bias.reshape(1, Cout).astype(jnp.float32))

    adj_f = adj.astype(jnp.float32)
    adj_diag = jnp.diagonal(adj_f).reshape(N, 1)

    cparams = pltpu.CompilerParams(
        dimension_semantics=("parallel",),
        vmem_limit_bytes=32 * 1024 * 1024)

    # ---- kernel 1: GATConv + per-batch BN partial stats, grid over batch ----
    hp, stats = pl.pallas_call(
        gat_conv_kernel,
        out_shape=(jax.ShapeDtypeStruct((B * N, C_pad), jnp.float32),
                   jax.ShapeDtypeStruct((B, 2, C_pad), jnp.float32)),
        grid_spec=pltpu.PrefetchScalarGridSpec(
            num_scalar_prefetch=0,
            grid=(B,),
            in_specs=[
                pl.BlockSpec((1, N, Cin), lambda b: (b, 0, 0)),
                pl.BlockSpec((Cin, C_ext), lambda b: (0, 0)),
                pl.BlockSpec((N, N), lambda b: (0, 0)),
                pl.BlockSpec((N, 1), lambda b: (0, 0)),
                pl.BlockSpec((1, C_pad), lambda b: (0, 0)),
            ],
            out_specs=[
                pl.BlockSpec((N, C_pad), lambda b: (b, 0)),
                pl.BlockSpec((1, 2, C_pad), lambda b: (b, 0, 0)),
            ]),
        compiler_params=cparams,
    )(x, w_ext, adj_f, adj_diag, bias_p)

    # ---- BatchNorm1d finalize (tiny (2, C_pad) math — plain JAX glue) ----
    cnt = float(B * N)
    tot = jnp.sum(stats, axis=0)                      # (2, C_pad): [sum; sumsq]
    mean = tot[0] / cnt
    var = jnp.maximum(tot[1] / cnt - mean * mean, 0.0)
    gamma_p = jnp.zeros((C_pad,), jnp.float32).at[:Cout].set(
        gamma.reshape(Cout).astype(jnp.float32))
    beta_p = jnp.zeros((C_pad,), jnp.float32).at[:Cout].set(
        beta.reshape(Cout).astype(jnp.float32))
    scale = gamma_p * lax.rsqrt(var + BN_EPS)
    shift = beta_p - mean * scale
    scale_shift = jnp.stack([scale, shift], axis=0)   # (2, C_pad)

    # ---- kernel 2: fused affine (BN) + ReLU over the flattened (B*N, C_pad) slab ----
    total = B * N
    if total <= 1024 or total % 8 != 0:
        TM = total
    else:
        TM = next(t for t in (1024, 512, 256, 128, 64, 32, 16, 8) if total % t == 0)
    grid2 = total // TM

    out_p = pl.pallas_call(
        bn_relu_kernel,
        out_shape=jax.ShapeDtypeStruct((total, C_pad), jnp.float32),
        grid_spec=pltpu.PrefetchScalarGridSpec(
            num_scalar_prefetch=0,
            grid=(grid2,),
            in_specs=[
                pl.BlockSpec((TM, C_pad), lambda i: (i, 0)),
                pl.BlockSpec((2, C_pad), lambda i: (0, 0)),
            ],
            out_specs=pl.BlockSpec((TM, C_pad), lambda i: (i, 0))),
        compiler_params=cparams,
    )(hp, scale_shift)

    return out_p[:, :Cout].reshape(B, N, Cout)


if __name__ == "__main__":
    key = jax.random.PRNGKey(0)
    B, N, Cin, Cout = 2, 16, 4, 32
    k_adj, k_w, k_a, k_b, k_x = jax.random.split(key, 5)

    # deterministic adjacency (binary, with self-loops so every row has a neighbor)
    adj = (jax.random.uniform(k_adj, (N, N)) > 0.5).astype(jnp.float32)
    adj = jnp.maximum(adj, jnp.eye(N, dtype=jnp.float32))

    # deterministic xavier_uniform-style init (gain = 1.414), matching module shapes
    gain = 1.414
    bound_W = gain * (6.0 / (Cin * Cout + 2 * Cout)) ** 0.5
    W = jax.random.uniform(k_w, (2, Cin, Cout), jnp.float32, -bound_W, bound_W)
    bound_a = gain * (6.0 / (2 * Cout + 1)) ** 0.5
    a = jax.random.uniform(k_a, (2 * Cout, 1), jnp.float32, -bound_a, bound_a)
    stdv = 1.0 / (Cout ** 0.5)
    bias = jax.random.uniform(k_b, (1, Cout), jnp.float32, -stdv, stdv)

    # BatchNorm1d affine params at PyTorch defaults (gamma=1, beta=0)
    gamma = jnp.ones((1, Cout), jnp.float32)
    beta = jnp.zeros((1, Cout), jnp.float32)

    x = jax.random.normal(k_x, (B, N, Cin), jnp.float32)

    out = gat_block(x, W, a, adj, bias, gamma, beta)
    jax.block_until_ready(out)
    assert out.shape == (B, N, Cout)
    print("KERNEL_OK")
</pallas_src>

<mosaic_0001>
module attributes {stable_mosaic.version = 11 : i64} {
  func.func @gat_conv_kernel(%arg0: i32, %arg1: memref<1x16x4xf32, #tpu.memory_space<vmem>>, %arg2: memref<4x384xf32, #tpu.memory_space<vmem>>, %arg3: memref<16x16xf32, #tpu.memory_space<vmem>>, %arg4: memref<16x1xf32, #tpu.memory_space<vmem>>, %arg5: memref<1x128xf32, #tpu.memory_space<vmem>>, %arg6: memref<16x128xf32, #tpu.memory_space<vmem>>, %arg7: memref<1x2x128xf32, #tpu.memory_space<vmem>>) attributes {dimension_semantics = [#tpu.dimension_semantics<parallel>], iteration_bounds = array<i64: 2>, scalar_prefetch = 0 : i64, scratch_operands = 0 : i64, tpu.core_type = #tpu.core_type<tc>, window_params = [{transform_indices = @transform_0, window_bounds = array<i64: 1, 16, 4>}, {pipeline_mode = #tpu.pipeline_mode<synchronous>, transform_indices = @transform_1, window_bounds = array<i64: 4, 384>}, {pipeline_mode = #tpu.pipeline_mode<synchronous>, transform_indices = @transform_2, window_bounds = array<i64: 16, 16>}, {pipeline_mode = #tpu.pipeline_mode<synchronous>, transform_indices = @transform_3, window_bounds = array<i64: 16, 1>}, {pipeline_mode = #tpu.pipeline_mode<synchronous>, transform_indices = @transform_4, window_bounds = array<i64: 1, 128>}, {transform_indices = @transform_5, window_bounds = array<i64: 16, 128>}, {transform_indices = @transform_6, window_bounds = array<i64: 1, 2, 128>}]} {
    %c0 = arith.constant 0 : index
    %c0_0 = arith.constant 0 : index
    %c0_1 = arith.constant 0 : index
    %0 = vector.load %arg1[%c0, %c0_0, %c0_1] : memref<1x16x4xf32, #tpu.memory_space<vmem>>, vector<1x16x4xf32>
    %1 = vector.shape_cast %0 : vector<1x16x4xf32> to vector<16x4xf32>
    %c0_2 = arith.constant 0 : index
    %c0_3 = arith.constant 0 : index
    %2 = vector.load %arg2[%c0_2, %c0_3] : memref<4x384xf32, #tpu.memory_space<vmem>>, vector<4x384xf32>
    %c0_4 = arith.constant 0 : index
    %c0_5 = arith.constant 0 : index
    %3 = vector.load %arg3[%c0_4, %c0_5] : memref<16x16xf32, #tpu.memory_space<vmem>>, vector<16x16xf32>
    %c0_6 = arith.constant 0 : index
    %c0_7 = arith.constant 0 : index
    %4 = vector.load %arg4[%c0_6, %c0_7] : memref<16x1xf32, #tpu.memory_space<vmem>>, vector<16x1xf32>
    %c0_8 = arith.constant 0 : index
    %c0_9 = arith.constant 0 : index
    %5 = vector.load %arg5[%c0_8, %c0_9] : memref<1x128xf32, #tpu.memory_space<vmem>>, vector<1x128xf32>
    %cst = arith.constant dense<0.000000e+00> : vector<16x384xf32>
    %6 = tpu.matmul %1, %2, %cst {dimension_numbers = #tpu.dot_dimension_numbers<[1], [0], [0], [1], [0, 0, 1, 1], [], []>} : vector<16x4xf32>, vector<4x384xf32>, vector<16x384xf32> -> vector<16x384xf32>
    %7 = vector.extract_strided_slice %6 {offsets = [0, 0], sizes = [16, 128], strides = [1, 1]} : vector<16x384xf32> to vector<16x128xf32>
    %8 = vector.extract_strided_slice %6 {offsets = [0, 128], sizes = [16, 128], strides = [1, 1]} : vector<16x384xf32> to vector<16x128xf32>
    %9 = vector.extract_strided_slice %6 {offsets = [0, 256], sizes = [16, 2], strides = [1, 1]} : vector<16x384xf32> to vector<16x2xf32>
    %10 = vector.extract_strided_slice %9 {offsets = [0, 0], sizes = [16, 1], strides = [1, 1]} : vector<16x2xf32> to vector<16x1xf32>
    %11 = vector.extract_strided_slice %9 {offsets = [0, 1], sizes = [16, 1], strides = [1, 1]} : vector<16x2xf32> to vector<16x1xf32>
    %12 = tpu.transpose %11, [1, 0] : vector<16x1xf32> -> vector<1x16xf32>
    %13 = vector.broadcast %10 : vector<16x1xf32> to vector<16x16xf32>
    %14 = vector.broadcast %12 : vector<1x16xf32> to vector<16x16xf32>
    %15 = arith.addf %13, %14 : vector<16x16xf32>
    %cst_10 = arith.constant 0.000000e+00 : f32
    %16 = vector.broadcast %cst_10 : f32 to vector<16x16xf32>
    %17 = arith.cmpf ogt, %15, %16 : vector<16x16xf32>
    %cst_11 = arith.constant 2.000000e-01 : f32
    %18 = vector.broadcast %cst_11 : f32 to vector<16x16xf32>
    %19 = arith.mulf %18, %15 : vector<16x16xf32>
    %20 = arith.select %17, %15, %19 : vector<16x16xi1>, vector<16x16xf32>
    %cst_12 = arith.constant 0.000000e+00 : f32
    %21 = vector.broadcast %cst_12 : f32 to vector<16x16xf32>
    %22 = arith.cmpf ogt, %3, %21 : vector<16x16xf32>
    %cst_13 = arith.constant -9.000000e+15 : f32
    %23 = vector.broadcast %cst_13 : f32 to vector<16x16xf32>
    %24 = arith.select %22, %20, %23 : vector<16x16xi1>, vector<16x16xf32>
    %cst_14 = arith.constant dense<0xFF800000> : vector<16xf32>
    %25 = vector.multi_reduction <maximumf>, %24, %cst_14 [1] : vector<16x16xf32> to vector<16xf32>
    %26 = vector.shape_cast %25 : vector<16xf32> to vector<16x1xf32>
    %27 = vector.broadcast %26 : vector<16x1xf32> to vector<16x16xf32>
    %28 = arith.subf %24, %27 : vector<16x16xf32>
    %29 = math.exp %28 : vector<16x16xf32>
    %cst_15 = arith.constant dense<0.000000e+00> : vector<16xf32>
    %30 = vector.multi_reduction <add>, %29, %cst_15 [1] : vector<16x16xf32> to vector<16xf32>
    %31 = vector.shape_cast %30 : vector<16xf32> to vector<16x1xf32>
    %32 = tpu.reciprocal %31 {approx = true} : vector<16x1xf32> -> vector<16x1xf32>
    %33 = vector.extract_strided_slice %9 {offsets = [0, 1], sizes = [16, 1], strides = [1, 1]} : vector<16x2xf32> to vector<16x1xf32>
    %34 = arith.addf %10, %33 : vector<16x1xf32>
    %cst_16 = arith.constant 0.000000e+00 : f32
    %35 = vector.broadcast %cst_16 : f32 to vector<16x1xf32>
    %36 = arith.cmpf ogt, %34, %35 : vector<16x1xf32>
    %cst_17 = arith.constant 2.000000e-01 : f32
    %37 = vector.broadcast %cst_17 : f32 to vector<16x1xf32>
    %38 = arith.mulf %37, %34 : vector<16x1xf32>
    %39 = arith.select %36, %34, %38 : vector<16x1xi1>, vector<16x1xf32>
    %cst_18 = arith.constant 0.000000e+00 : f32
    %40 = vector.broadcast %cst_18 : f32 to vector<16x1xf32>
    %41 = arith.cmpf ogt, %4, %40 : vector<16x1xf32>
    %cst_19 = arith.constant -9.000000e+15 : f32
    %42 = vector.broadcast %cst_19 : f32 to vector<16x1xf32>
    %43 = arith.select %41, %39, %42 : vector<16x1xi1>, vector<16x1xf32>
    %44 = arith.subf %43, %26 : vector<16x1xf32>
    %45 = math.exp %44 : vector<16x1xf32>
    %46 = arith.subf %7, %8 : vector<16x128xf32>
    %cst_20 = arith.constant 5.000000e-01 : f32
    %47 = vector.broadcast %cst_20 : f32 to vector<16x128xf32>
    %48 = arith.mulf %47, %46 : vector<16x128xf32>
    %cst_21 = arith.constant dense<0.000000e+00> : vector<16x128xf32>
    %49 = tpu.matmul %29, %48, %cst_21 {dimension_numbers = #tpu.dot_dimension_numbers<[1], [0], [0], [1], [0, 0, 1, 1], [], []>} : vector<16x16xf32>, vector<16x128xf32>, vector<16x128xf32> -> vector<16x128xf32>
    %50 = vector.broadcast %45 : vector<16x1xf32> to vector<16x128xf32>
    %51 = arith.mulf %50, %8 : vector<16x128xf32>
    %52 = arith.addf %49, %51 : vector<16x128xf32>
    %53 = vector.broadcast %32 : vector<16x1xf32> to vector<16x128xf32>
    %54 = arith.mulf %52, %53 : vector<16x128xf32>
    %55 = vector.broadcast %5 : vector<1x128xf32> to vector<16x128xf32>
    %56 = arith.addf %54, %55 : vector<16x128xf32>
    %c0_22 = arith.constant 0 : index
    %c0_23 = arith.constant 0 : index
    %57 = vector.load %arg6[%c0_22, %c0_23] : memref<16x128xf32, #tpu.memory_space<vmem>>, vector<16x128xf32>
    tpu.vector_store %arg6[%c0_22, %c0_23], %56 {strides = array<i32>} : memref<16x128xf32, #tpu.memory_space<vmem>>, vector<16x128xf32>,
    %cst_24 = arith.constant dense<0.000000e+00> : vector<128xf32>
    %58 = vector.multi_reduction <add>, %56, %cst_24 [0] : vector<16x128xf32> to vector<128xf32>
    %59 = vector.shape_cast %58 : vector<128xf32> to vector<1x128xf32>
    %60 = arith.mulf %56, %56 : vector<16x128xf32>
    %cst_25 = arith.constant dense<0.000000e+00> : vector<128xf32>
    %61 = vector.multi_reduction <add>, %60, %cst_25 [0] : vector<16x128xf32> to vector<128xf32>
    %62 = vector.shape_cast %61 : vector<128xf32> to vector<1x128xf32>
    %63 = tpu.concatenate %59, %62 in 0 : vector<1x128xf32>, vector<1x128xf32> -> vector<2x128xf32>
    %c0_26 = arith.constant 0 : index
    %c0_27 = arith.constant 0 : index
    %c0_28 = arith.constant 0 : index
    %64 = vector.load %arg7[%c0_26, %c0_27, %c0_28] : memref<1x2x128xf32, #tpu.memory_space<vmem>>, vector<1x2x128xf32>
    %65 = vector.shape_cast %64 : vector<1x2x128xf32> to vector<2x128xf32>
    %66 = vector.shape_cast %63 : vector<2x128xf32> to vector<1x2x128xf32>
    tpu.vector_store %arg7[%c0_26, %c0_27, %c0_28], %66 {strides = array<i32>} : memref<1x2x128xf32, #tpu.memory_space<vmem>>, vector<1x2x128xf32>,
    return
  }
  func.func @transform_0(%arg0: i32) -> (i32, i32, i32) {
    %c0_i32 = arith.constant 0 : i32
    %c0_i32_0 = arith.constant 0 : i32
    %c0_i32_1 = arith.constant 0 : i32
    return %arg0, %c0_i32, %c0_i32_0 : i32, i32, i32
  }
  func.func @transform_1(%arg0: i32) -> (i32, i32) {
    %c0_i32 = arith.constant 0 : i32
    %c0_i32_0 = arith.constant 0 : i32
    %c0_i32_1 = arith.constant 0 : i32
    return %c0_i32, %c0_i32_0 : i32, i32
  }
  func.func @transform_2(%arg0: i32) -> (i32, i32) {
    %c0_i32 = arith.constant 0 : i32
    %c0_i32_0 = arith.constant 0 : i32
    %c0_i32_1 = arith.constant 0 : i32
    return %c0_i32, %c0_i32_0 : i32, i32
  }
  func.func @transform_3(%arg0: i32) -> (i32, i32) {
    %c0_i32 = arith.constant 0 : i32
    %c0_i32_0 = arith.constant 0 : i32
    %c0_i32_1 = arith.constant 0 : i32
    return %c0_i32, %c0_i32_0 : i32, i32
  }
  func.func @transform_4(%arg0: i32) -> (i32, i32) {
    %c0_i32 = arith.constant 0 : i32
    %c0_i32_0 = arith.constant 0 : i32
    %c0_i32_1 = arith.constant 0 : i32
    return %c0_i32, %c0_i32_0 : i32, i32
  }
  func.func @transform_5(%arg0: i32) -> (i32, i32) {
    %c0_i32 = arith.constant 0 : i32
    %c0_i32_0 = arith.constant 0 : i32
    return %arg0, %c0_i32 : i32, i32
  }
  func.func @transform_6(%arg0: i32) -> (i32, i32, i32) {
    %c0_i32 = arith.constant 0 : i32
    %c0_i32_0 = arith.constant 0 : i32
    %c0_i32_1 = arith.constant 0 : i32
    return %arg0, %c0_i32, %c0_i32_0 : i32, i32, i32
  }
}

</mosaic_0001>

<llo_original>
// kernel: tpu_custom_call.1
$region0: #{tpu_custom_call.1}
  #allocation0 [shape = 'u32[]', space=smem, size = 0x4, offset = 0x4, fixed_abs, tag = 'smem constant byte address 0x4 - core index']
  #allocation1 [shape = 'u32[72,128]{1,0:T(1,128)}', space=vmem, size = 0x9000, scoped, tag = 'internal scratch']
  %s0 = inlined_call_operand.vmem [shape: f32[2,16,4], index: 0, kind: input, shape index: {}]
  %s1 = inlined_call_operand.vmem [shape: f32[4,384], index: 1, kind: input, shape index: {}]
  %s2 = inlined_call_operand.vmem [shape: f32[16,16], index: 2, kind: input, shape index: {}]
  %s3 = inlined_call_operand.vmem [shape: f32[16,1], index: 3, kind: input, shape index: {}]
  %s4 = inlined_call_operand.vmem [shape: f32[1,128], index: 4, kind: input, shape index: {}]
  %s5 = inlined_call_operand.hbm [shape: f32[32,128], index: 5, kind: output, shape index: {0}]
  %s6 = inlined_call_operand.hbm [shape: f32[2,2,128], index: 6, kind: output, shape index: {1}]
  %7 = xla_tuple %s5, %s6
  %s8 = sld [smem:[#allocation0]]
  $region61: #{tpu_custom_call.1} parent=0
    _
  %s10 = ssub.s32 1, %s8
  %s11 = scalar_select 0, %s10, %s8
  $region1: #{tpu_custom_call.1} parent=0
    #allocation2 [shape = 'u8[16384]{0}', space=vmem, size = 0x4000, scoped, tag = 'output window, operand 0']
    #allocation3 [shape = 's32[2]{0}', space=sflag, size = 0x8, scoped, tag = 'scoped memory for tpu_custom_call.1']
    #allocation4 [shape = 'u8[2048]{0}', space=vmem, size = 0x800, scoped, tag = 'output window, operand 1']
    #allocation5 [shape = 's32[2]{0}', space=sflag, size = 0x8, scoped, tag = 'scoped memory for tpu_custom_call.1']
    %12 = vsyncpa [#allocation3], 0
    %s13 = scalar_lea.sflag [#allocation3], 1
    %14 = vsyncpa %s13, 0
    %15 = vsyncpa [#allocation5], 0
    %s16 = scalar_lea.sflag [#allocation5], 1
    %17 = vsyncpa %s16, 0
    loop: start=0, step=1, limit=4
    $region2: #{tpu_custom_call.1} parent=1 // loop_pre_header
      _
    $region3: #{tpu_custom_call.1} parent=1 // loop_header
      %s19 = sphi 0, %s23
      %p20 = scmp.ge.s32.totalorder %s19, 4
      %s29 = sphi 0, %s31
      %s32 = sphi 0, %s29
      %s33 = sphi 0, %s32
      %s49 = sphi 0, %s33
      %s53 = sphi 0, %s53
      %s55 = sphi 0, %s53
      %s56 = sphi 0, %s55
      %s70 = sphi 0, %s56
      %s74 = sphi 0, %s74
      %s76 = sphi 0, %s74
      %s77 = sphi 0, %s76
      %s91 = sphi 0, %s77
      %s95 = sphi 0, %s95
      %s97 = sphi 0, %s95
      %s98 = sphi 0, %s97
      %s112 = sphi 0, %s98
      %s116 = sphi 0, %s116
      %s118 = sphi 0, %s116
      %s119 = sphi 0, %s118
      %s133 = sphi 0, %s119
      %s139 = sphi 0, %s141
      %s142 = sphi 0, %s139
      %s143 = sphi 0, %s142
      %s159 = sphi 0, %s143
      %s165 = sphi 0, %s167
      %s168 = sphi 0, %s165
      %s169 = sphi 0, %s168
      %s185 = sphi 0, %s169
    $region4: #{tpu_custom_call.1} parent=1 // loop_header_branch
      %22 = sbr.rel (%p20) target = $region8
    $region5: #{tpu_custom_call.1} parent=1 // loop_body
      %s24 = ssub.s32 %s19, 1
      %s25 = ssub.s32 %s19, 2
      %s26 = sadd.s32 %s19, 1
      %s27 = ssub.s32 %s19, %s26
      %p28 = scmp.eq.s32.totalorder %s27, 0
      %s30 = sadd.s32 %s29, 1
      %s31 = scalar_select %p28, %s29, %s30
      %p34 = pneg %p28
      %p35 = scmp.eq.s32.totalorder %s19, 1
      %p36 = por %p34, %p35
      %p37 = scmp.ne.s32.totalorder %s29, %s32
      %p38 = scmp.eq.s32.totalorder %s19, 0
      %p39 = por %p37, %p38
      %p40 = scmp.ne.s32.totalorder %s29, %s32
      %p41 = scmp.eq.s32.totalorder %s24, 1
      %p42 = por %p40, %p41
      %p43 = scmp.ne.s32.totalorder %s32, %s33
      %p44 = scmp.eq.s32.totalorder %s24, 0
      %p45 = por %p43, %p44
      %p46 = scmp.ne.s32.totalorder %s32, %s33
      %p47 = scmp.eq.s32.totalorder %s25, 1
      %p48 = por %p46, %p47
      %p50 = scmp.ne.s32.totalorder %s33, %s49
      %p51 = scmp.eq.s32.totalorder %s25, 0
      %p52 = por %p50, %p51
      %s54 = sadd.s32 %s53, 1
      %p57 = scmp.eq.s32.totalorder %s19, 1
      %p58 = scmp.ne.s32.totalorder %s53, %s55
      %p59 = scmp.eq.s32.totalorder %s19, 0
      %p60 = por %p58, %p59
      %p61 = scmp.ne.s32.totalorder %s53, %s55
      %p62 = scmp.eq.s32.totalorder %s24, 1
      %p63 = por %p61, %p62
      %p64 = scmp.ne.s32.totalorder %s55, %s56
      %p65 = scmp.eq.s32.totalorder %s24, 0
      %p66 = por %p64, %p65
      %p67 = scmp.ne.s32.totalorder %s55, %s56
      %p68 = scmp.eq.s32.totalorder %s25, 1
      %p69 = por %p67, %p68
      %p71 = scmp.ne.s32.totalorder %s56, %s70
      %p72 = scmp.eq.s32.totalorder %s25, 0
      %p73 = por %p71, %p72
      %s75 = sadd.s32 %s74, 1
      %p78 = scmp.eq.s32.totalorder %s19, 1
      %p79 = scmp.ne.s32.totalorder %s74, %s76
      %p80 = scmp.eq.s32.totalorder %s19, 0
      %p81 = por %p79, %p80
      %p82 = scmp.ne.s32.totalorder %s74, %s76
      %p83 = scmp.eq.s32.totalorder %s24, 1
      %p84 = por %p82, %p83
      %p85 = scmp.ne.s32.totalorder %s76, %s77
      %p86 = scmp.eq.s32.totalorder %s24, 0
      %p87 = por %p85, %p86
      %p88 = scmp.ne.s32.totalorder %s76, %s77
      %p89 = scmp.eq.s32.totalorder %s25, 1
      %p90 = por %p88, %p89
      %p92 = scmp.ne.s32.totalorder %s77, %s91
      %p93 = scmp.eq.s32.totalorder %s25, 0
      %p94 = por %p92, %p93
      %s96 = sadd.s32 %s95, 1
      %p99 = scmp.eq.s32.totalorder %s19, 1
      %p100 = scmp.ne.s32.totalorder %s95, %s97
      %p101 = scmp.eq.s32.totalorder %s19, 0
      %p102 = por %p100, %p101
      %p103 = scmp.ne.s32.totalorder %s95, %s97
      %p104 = scmp.eq.s32.totalorder %s24, 1
      %p105 = por %p103, %p104
      %p106 = scmp.ne.s32.totalorder %s97, %s98
      %p107 = scmp.eq.s32.totalorder %s24, 0
      %p108 = por %p106, %p107
      %p109 = scmp.ne.s32.totalorder %s97, %s98
      %p110 = scmp.eq.s32.totalorder %s25, 1
      %p111 = por %p109, %p110
      %p113 = scmp.ne.s32.totalorder %s98, %s112
      %p114 = scmp.eq.s32.totalorder %s25, 0
      %p115 = por %p113, %p114
      %s117 = sadd.s32 %s116, 1
      %p120 = scmp.eq.s32.totalorder %s19, 1
      %p121 = scmp.ne.s32.totalorder %s116, %s118
      %p122 = scmp.eq.s32.totalorder %s19, 0
      %p123 = por %p121, %p122
      %p124 = scmp.ne.s32.totalorder %s116, %s118
      %p125 = scmp.eq.s32.totalorder %s24, 1
      %p126 = por %p124, %p125
      %p127 = scmp.ne.s32.totalorder %s118, %s119
      %p128 = scmp.eq.s32.totalorder %s24, 0
      %p129 = por %p127, %p128
      %p130 = scmp.ne.s32.totalorder %s118, %s119
      %p131 = scmp.eq.s32.totalorder %s25, 1
      %p132 = por %p130, %p131
      %p134 = scmp.ne.s32.totalorder %s119, %s133
      %p135 = scmp.eq.s32.totalorder %s25, 0
      %p136 = por %p134, %p135
      %s137 = ssub.s32 %s19, %s26
      %p138 = scmp.eq.s32.totalorder %s137, 0
      %s140 = sadd.s32 %s139, 1
      %s141 = scalar_select %p138, %s139, %s140
      %p144 = pneg %p138
      %p145 = scmp.eq.s32.totalorder %s19, 1
      %p146 = por %p144, %p145
      %p147 = scmp.ne.s32.totalorder %s139, %s142
      %p148 = scmp.eq.s32.totalorder %s19, 0
      %p149 = por %p147, %p148
      %p150 = scmp.ne.s32.totalorder %s139, %s142
      %p151 = scmp.eq.s32.totalorder %s24, 1
      %p152 = por %p150, %p151
      %p153 = scmp.ne.s32.totalorder %s142, %s143
      %p154 = scmp.eq.s32.totalorder %s24, 0
      %p155 = por %p153, %p154
      %p156 = scmp.ne.s32.totalorder %s142, %s143
      %p157 = scmp.eq.s32.totalorder %s25, 1
      %p158 = por %p156, %p157
      %p160 = scmp.ne.s32.totalorder %s143, %s159
      %p161 = scmp.eq.s32.totalorder %s25, 0
      %p162 = por %p160, %p161
      %s163 = ssub.s32 %s19, %s26
      %p164 = scmp.eq.s32.totalorder %s163, 0
      %s166 = sadd.s32 %s165, 1
      %s167 = scalar_select %p164, %s165, %s166
      %p170 = pneg %p164
      %p171 = scmp.eq.s32.totalorder %s19, 1
      %p172 = por %p170, %p171
      %p173 = scmp.ne.s32.totalorder %s165, %s168
      %p174 = scmp.eq.s32.totalorder %s19, 0
      %p175 = por %p173, %p174
      %p176 = scmp.ne.s32.totalorder %s165, %s168
      %p177 = scmp.eq.s32.totalorder %s24, 1
      %p178 = por %p176, %p177
      %p179 = scmp.ne.s32.totalorder %s168, %s169
      %p180 = scmp.eq.s32.totalorder %s24, 0
      %p181 = por %p179, %p180
      %p182 = scmp.ne.s32.totalorder %s168, %s169
      %p183 = scmp.eq.s32.totalorder %s25, 1
      %p184 = por %p182, %p183
      %p186 = scmp.ne.s32.totalorder %s169, %s185
      %p187 = scmp.eq.s32.totalorder %s25, 0
      %p188 = por %p186, %p187
      %p189 = scmp.le.s32.totalorder 1, %s19
      %p190 = scmp.lt.s32.totalorder %s19, 3
      %p191 = pnand %p189, %p190
      %p192 = pneg %p191
      // Predicated region
      $region9: #{tpu_custom_call.1} parent=5 // pred_check
        _
      $region10: #{tpu_custom_call.1} parent=5 // pred_check_branch
        %194 = sbr.rel (%p191) target = $region12
      $region11: #{tpu_custom_call.1} parent=5 // pred_region
        %s195 = ssub.s32 %s19, 1
        // Predicated region
        $region13: #{tpu_custom_call.1} parent=11 // pred_check
          %p196 = pneg %p66
        $region14: #{tpu_custom_call.1} parent=11 // pred_check_branch
          %198 = sbr.rel (%p196) target = $region16
        $region15: #{tpu_custom_call.1} parent=11 // pred_region
          _
        $region16: #{tpu_custom_call.1} parent=11 // pred_fallthru
          _
        // Predicated region
        $region17: #{tpu_custom_call.1} parent=11 // pred_check
          %p199 = pneg %p87
        $region18: #{tpu_custom_call.1} parent=11 // pred_check_branch
          %201 = sbr.rel (%p199) target = $region20
        $region19: #{tpu_custom_call.1} parent=11 // pred_region
          _
        $region20: #{tpu_custom_call.1} parent=11 // pred_fallthru
          _
        // Predicated region
        $region21: #{tpu_custom_call.1} parent=11 // pred_check
          %p202 = pneg %p108
        $region22: #{tpu_custom_call.1} parent=11 // pred_check_branch
          %204 = sbr.rel (%p202) target = $region24
        $region23: #{tpu_custom_call.1} parent=11 // pred_region
          _
        $region24: #{tpu_custom_call.1} parent=11 // pred_fallthru
          _
        // Predicated region
        $region25: #{tpu_custom_call.1} parent=11 // pred_check
          %p205 = pneg %p129
        $region26: #{tpu_custom_call.1} parent=11 // pred_check_branch
          %207 = sbr.rel (%p205) target = $region28
        $region27: #{tpu_custom_call.1} parent=11 // pred_region
          _
        $region28: #{tpu_custom_call.1} parent=11 // pred_fallthru
          _
      $region12: #{tpu_custom_call.1} parent=5 // pred_fallthru
        _
      %p208 = scmp.lt.s32.totalorder %s19, 2
      // Predicated region
      $region29: #{tpu_custom_call.1} parent=5 // pred_check
        %p209 = pneg %p208
      $region30: #{tpu_custom_call.1} parent=5 // pred_check_branch
        %211 = sbr.rel (%p209) target = $region32
      $region31: #{tpu_custom_call.1} parent=5 // pred_region
        // Predicated region
        $region33: #{tpu_custom_call.1} parent=31 // pred_check
          %p212 = pneg %p39
        $region34: #{tpu_custom_call.1} parent=31 // pred_check_branch
          %214 = sbr.rel (%p212) target = $region36
        $region35: #{tpu_custom_call.1} parent=31 // pred_region
          %p215 = scmp.lt.s32.totalorder %s19, 1
          %s216 = scalar_select %p215, %s19, 1
          %s217 = smul.addr %s216, 2
          %s218 = smul.addr %s217, 8
          %s219 = scalar_lea.vmem %s0, %s218
        $region36: #{tpu_custom_call.1} parent=31 // pred_fallthru
          _
      $region32: #{tpu_custom_call.1} parent=5 // pred_fallthru
        _
      %p220 = scmp.le.s32.totalorder 1, %s19
      %p221 = scmp.lt.s32.totalorder %s19, 3
      %p222 = pnand %p220, %p221
      %p223 = pneg %p222
      // Predicated region
      $region37: #{tpu_custom_call.1} parent=5 // pred_check
        _
      $region38: #{tpu_custom_call.1} parent=5 // pred_check_branch
        %225 = sbr.rel (%p222) target = $region40
      $region39: #{tpu_custom_call.1} parent=5 // pred_region
        %s226 = ssub.s32 %s19, 1
        %p227 = scmp.lt.s32.totalorder %s24, 1
        %s228 = scalar_select %p227, %s24, 1
        %s229 = smul.addr %s228, 2
        %s230 = smul.addr %s229, 8
        %s231 = scalar_lea.vmem %s0, %s230
        %p232 = pneg %p45
        %p233 = pneg %p42
        %p234 = pneg %p66
        %p235 = pneg %p63
        %p236 = pneg %p87
        %p237 = pneg %p84
        %p238 = pneg %p108
        %p239 = pneg %p105
        %p240 = pneg %p129
        %p241 = pneg %p126
        %p242 = pneg %p155
        %p243 = pneg %p152
        %s244 = sand.u32 %s142, 1
        %s245 = scalar_lea.sflag [#allocation3], %s244
        %s246 = sand.u32 %s142, 1
        %s247 = smul.addr %s246, 16
        %s248 = scalar_lea.vmem [#allocation2], %s247
        %p249 = pneg %p181
        %p250 = pneg %p178
        %s251 = sand.u32 %s168, 1
        %s252 = scalar_lea.sflag [#allocation5], %s251
        %s253 = sand.u32 %s168, 1
        %s254 = smul.addr %s253, 2
        %s255 = scalar_lea.vmem [#allocation4], %s254
        %p256 = scmp.lt.s32.totalorder %s24, 1
        %s257 = scalar_select %p256, %s24, 1
        %s258 = smul.addr %s257, 2
        %s259 = smul.addr %s258, 8
        %s260 = scalar_lea.vmem %s0, %s259
        %s261 = smul.u32 2, %s24
        %v262 = vld [vmem:[%s260] sm:$0xff]
        %v263 = vld [vmem:[%s260 + $0x8] sm:$0xff]
        %v264 = vld [vmem:[%s1] sm:$0xff]
        %v265 = vld [vmem:[%s1 + $0x8] sm:$0xf]
        %v266 = vld [vmem:[%s2] sm:$0xff]
        %v267 = vld [vmem:[%s2 + $0x8] sm:$0xff]
        %v268 = vld [vmem:[%s3] sm:$0xff]
        %v269 = vld [vmem:[%s3 + $0x8] sm:$0xff]
        %v270 = vld [vmem:[%s4] sm:$0x1]
        %273 = vst [vmem:[#allocation1] ss:$2 sm:$0xff] %v264
        %s274 = scalar_lea.vmem [#allocation1], 16
        %275 = vst [vmem:[%s274] ss:$2 sm:$0xff] %v265
        %v276 = vld.sshfl [vmem:[#allocation1] sm:$0xff pattern:$0x75316420]
        %v277 = vld.sshfl [vmem:[#allocation1 + $0x8] sm:$0xff pattern:$0x75316420]
        %v278 = vld.sshfl [vmem:[#allocation1 + $0x10] sm:$0xff pattern:$0x75316420]
        %vm279 = vcmask 31744
        %v281 = vsel %vm279, %v262, 0
        %v284 = vsel %vm279, %v263, 0
        %vm286 = vcmask 1043456
        %v287 = vsel %vm286, %v276, 0
        %v289 = vsel %vm286, %v277, 0
        %v291 = vsel %vm286, %v278, 0
        %293 = vmatpush.msra.mxu0 0.0
        %294 = vmatpush.msra.mxu0 0.0
        %295 = vmatpush.msra.mxu0 0.0
        %296 = vmatpush.msra.mxu0 0.0
        %297 = vmatpush.msra.mxu0 0.0
        %298 = vmatpush.msra.mxu0 0.0
        %299 = vmatpush.msra.mxu0 0.0
        %300 = vmatpush.msra.mxu0 0.0
        %301 = vmatpush.msra.mxu0 0.0
        %302 = vmatpush.msra.mxu0 0.0
        %303 = vmatpush.msra.mxu0 0.0
        %304 = vmatpush.msra.mxu0 0.0
        %305 = vmatpush.msra.mxu0 0.0
        %306 = vmatpush.msra.mxu0 0.0
        %307 = vmatpush.msra.mxu0 0.0
        %308 = vmatpush.msra.mxu0 %v287
        %309 = vmatmul.f32.gmra.mxu0 %v281
        %v310 = vpop.f32.mrf.mxu0
        %v311 = vadd.f32 0.0, %v310
        %312 = vmatmul.f32.gmra.mxu0 %v284
        %v313 = vpop.f32.mrf.mxu0
        %v314 = vadd.f32 0.0, %v313
        %315 = vdwg.mxu0
        %316 = vmatpush.msra.mxu0 0.0
        %317 = vmatpush.msra.mxu0 0.0
        %318 = vmatpush.msra.mxu0 0.0
        %319 = vmatpush.msra.mxu0 0.0
        %320 = vmatpush.msra.mxu0 0.0
        %321 = vmatpush.msra.mxu0 0.0
        %322 = vmatpush.msra.mxu0 0.0
        %323 = vmatpush.msra.mxu0 0.0
        %324 = vmatpush.msra.mxu0 0.0
        %325 = vmatpush.msra.mxu0 0.0
        %326 = vmatpush.msra.mxu0 0.0
        %327 = vmatpush.msra.mxu0 0.0
        %328 = vmatpush.msra.mxu0 0.0
        %329 = vmatpush.msra.mxu0 0.0
        %330 = vmatpush.msra.mxu0 0.0
        %331 = vmatpush.msra.mxu0 %v289
        %332 = vmatmul.f32.gmra.mxu0 %v281
        %v333 = vpop.f32.mrf.mxu0
        %v334 = vadd.f32 0.0, %v333
        %335 = vmatmul.f32.gmra.mxu0 %v284
        %v336 = vpop.f32.mrf.mxu0
        %v337 = vadd.f32 0.0, %v336
        %338 = vdwg.mxu0
        %339 = vmatpush.msra.mxu0 0.0
        %340 = vmatpush.msra.mxu0 0.0
        %341 = vmatpush.msra.mxu0 0.0
        %342 = vmatpush.msra.mxu0 0.0
        %343 = vmatpush.msra.mxu0 0.0
        %344 = vmatpush.msra.mxu0 0.0
        %345 = vmatpush.msra.mxu0 0.0
        %346 = vmatpush.msra.mxu0 0.0
        %347 = vmatpush.msra.mxu0 0.0
        %348 = vmatpush.msra.mxu0 0.0
        %349 = vmatpush.msra.mxu0 0.0
        %350 = vmatpush.msra.mxu0 0.0
        %351 = vmatpush.msra.mxu0 0.0
        %352 = vmatpush.msra.mxu0 0.0
        %353 = vmatpush.msra.mxu0 0.0
        %354 = vmatpush.msra.mxu0 %v291
        %355 = vmatmul.f32.gmra.mxu0 %v281
        %v356 = vpop.f32.mrf.mxu0
        %v357 = vadd.f32 0.0, %v356
        %358 = vmatmul.f32.gmra.mxu0 %v284
        %v359 = vpop.f32.mrf.mxu0
        %v360 = vadd.f32 0.0, %v359
        %361 = vdwg.mxu0
        %364 = vrot.lane.b32.xlu0 %v357, 127
        %v365 = vpop.permute.xlu0 %364
        %366 = vrot.lane.b32.xlu0 %v360, 127
        %v367 = vpop.permute.xlu0 %366
        %370 = vxpose.xlu0.b32.start [1/16] %v365, 128
        %371 = vxpose.xlu0.b32.cont [2/16] %v367, 128
        %372 = vxpose.xlu0.b32.cont [3/16] 0.0, 128
        %373 = vxpose.xlu0.b32.cont [4/16] 0.0, 128
        %374 = vxpose.xlu0.b32.cont [5/16] 0.0, 128
        %375 = vxpose.xlu0.b32.cont [6/16] 0.0, 128
        %376 = vxpose.xlu0.b32.cont [7/16] 0.0, 128
        %377 = vxpose.xlu0.b32.cont [8/16] 0.0, 128
        %378 = vxpose.xlu0.b32.cont [9/16] 0.0, 128
        %379 = vxpose.xlu0.b32.cont [10/16] 0.0, 128
        %380 = vxpose.xlu0.b32.cont [11/16] 0.0, 128
        %381 = vxpose.xlu0.b32.cont [12/16] 0.0, 128
        %382 = vxpose.xlu0.b32.cont [13/16] 0.0, 128
        %383 = vxpose.xlu0.b32.cont [14/16] 0.0, 128
        %384 = vxpose.xlu0.b32.cont [15/16] 0.0, 128
        %385 = vxpose.xlu0.b32.end [16/16] 0.0, 128
        %v386 = vpop.trf.xlu0
        %v387 = vpop.trf.xlu0
        %v388 = vpop.trf.xlu0
        %v389 = vpop.trf.xlu0
        %v390 = vpop.trf.xlu0
        %v391 = vpop.trf.xlu0
        %v392 = vpop.trf.xlu0
        %v393 = vpop.trf.xlu0
        %v394 = vpop.trf.xlu0
        %v395 = vpop.trf.xlu0
        %v396 = vpop.trf.xlu0
        %v397 = vpop.trf.xlu0
        %v398 = vpop.trf.xlu0
        %v399 = vpop.trf.xlu0
        %v400 = vpop.trf.xlu0
        %v401 = vpop.trf.xlu0
        %402 = vset.pattern.permute.xlu0 0
        %403 = vperm.xlu0 %402, %v357
        %v404 = vpop.permute.xlu0 %403
        %406 = vset.pattern.permute.xlu0 0
        %407 = vperm.xlu0 %406, %v360
        %v408 = vpop.permute.xlu0 %407
        %v410 = vperm.slane %v386, 0
        %v411 = vadd.f32 %v404, %v410
        %v412 = vadd.f32 %v408, %v410
        %vm413 = vcmp.gt.f32.partialorder %v411, 0.0
        %vm414 = vcmp.gt.f32.partialorder %v412, 0.0
        %v415 = vmul.f32 %v411, 0.2
        %v416 = vmul.f32 %v412, 0.2
        %v417 = vsel %vm413, %v411, %v415
        %v418 = vsel %vm414, %v412, %v416
        %vm419 = vcmp.gt.f32.partialorder %v266, 0.0
        %vm420 = vcmp.gt.f32.partialorder %v267, 0.0
        %v421 = vsel %vm419, %v417, -9e+15
        %v422 = vsel %vm420, %v418, -9e+15
        %vm423 = vcmask 130048
        %v424 = vsel %vm423, %v421, -inf
        %425 = vmax.xlane.f32.xlu0 %v424
        %v426 = vpop.xlane.xlu0 %425
        %v427 = vsel %vm423, %v422, -inf
        %428 = vmax.xlane.f32.xlu0 %v427
        %v429 = vpop.xlane.xlu0 %428
        %v430 = vsub.f32 %v421, %v426
        %v431 = vsub.f32 %v422, %v429
        %v432 = vmul.f32 %v430, 1.442695
        %v433 = vpow.pop %v432
        %v434 = vmul.f32 %v431, 1.442695
        %v435 = vpow.pop %v434
        %v436 = vsel %vm423, %v433, 0.0
        %437 = vadd.xlane.f32.xlu0 %v436
        %v438 = vpop.xlane.xlu0 %437
        %v439 = vsel %vm423, %v435, 0.0
        %440 = vadd.xlane.f32.xlu0 %v439
        %v441 = vpop.xlane.xlu0 %440
        %v442 = vrcp.pop %v438
        %v443 = vrcp.pop %v441
        %v444 = vadd.f32 %v357, %v365
        %v445 = vadd.f32 %v360, %v367
        %vm446 = vcmp.gt.f32.partialorder %v444, 0.0
        %vm447 = vcmp.gt.f32.partialorder %v445, 0.0
        %v448 = vmul.f32 %v444, 0.2
        %v449 = vmul.f32 %v445, 0.2
        %v450 = vsel %vm446, %v444, %v448
        %v451 = vsel %vm447, %v445, %v449
        %vm452 = vcmp.gt.f32.partialorder %v268, 0.0
        %vm453 = vcmp.gt.f32.partialorder %v269, 0.0
        %v454 = vsel %vm452, %v450, -9e+15
        %v455 = vsel %vm453, %v451, -9e+15
        %v456 = vsub.f32 %v454, %v426
        %v457 = vsub.f32 %v455, %v429
        %v458 = vmul.f32 %v456, 1.442695
        %v459 = vpow.pop %v458
        %v460 = vmul.f32 %v457, 1.442695
        %v461 = vpow.pop %v460
        %v462 = vsub.f32 %v311, %v334
        %v463 = vsub.f32 %v314, %v337
        %v464 = vmul.f32 %v462, 0.5
        %v465 = vmul.f32 %v463, 0.5
        %467 = vset.pattern.permute.xlu0 0
        %468 = vperm.xlu0 %467, %v459
        %v469 = vpop.permute.xlu0 %468
        %472 = vset.pattern.permute.xlu0 0
        %473 = vperm.xlu0 %472, %v461
        %v474 = vpop.permute.xlu0 %473
        %v476 = vmul.f32 %v469, %v334
        %v477 = vmul.f32 %v474, %v337
        %v479 = vsel %vm423, %v433, 0
        %v482 = vsel %vm423, %v435, 0
        %484 = vmatpush.msra.mxu0 0.0
        %485 = vmatpush.msra.mxu0 0.0
        %486 = vmatpush.msra.mxu0 0.0
        %487 = vmatpush.msra.mxu0 0.0
        %488 = vmatpush.msra.mxu0 0.0
        %489 = vmatpush.msra.mxu0 0.0
        %490 = vmatpush.msra.mxu0 0.0
        %491 = vmatpush.msra.mxu0 0.0
        %492 = vmatpush.msra.mxu0 0.0
        %493 = vmatpush.msra.mxu0 0.0
        %494 = vmatpush.msra.mxu0 0.0
        %495 = vmatpush.msra.mxu0 0.0
        %496 = vmatpush.msra.mxu0 0.0
        %497 = vmatpush.msra.mxu0 0.0
        %498 = vmatpush.msra.mxu0 %v465
        %499 = vmatpush.msra.mxu0 %v464
        %500 = vmatmul.f32.gmra.mxu0 %v479
        %v501 = vpop.f32.mrf.mxu0
        %v502 = vadd.f32 %v476, %v501
        %503 = vmatmul.f32.gmra.mxu0 %v482
        %v504 = vpop.f32.mrf.mxu0
        %v505 = vadd.f32 %v477, %v504
        %506 = vdwg.mxu0
        %v507 = vmul.f32 %v502, %v442
        %v508 = vmul.f32 %v505, %v443
        %v510 = vperm.slane %v270, 0
        %v512 = vadd.f32 %v507, %v510
        %v513 = vadd.f32 %v508, %v510
        %514 = vst [vmem:[%s248] sm:$0xff] %v512
        %515 = vst [vmem:[%s248 + $0x8] sm:$0xff] %v513
        %v516 = vadd.f32 %v512, %v513
        %v517 = vrot.slane %v516, 4
        %v518 = vadd.f32 %v516, %v517
        %v519 = vrot.slane %v518, 2
        %v520 = vadd.f32 %v518, %v519
        %v521 = vrot.slane %v520, 1
        %v522 = vadd.f32 %v520, %v521
        %v523 = vmul.f32 %v512, %v512
        %v524 = vmul.f32 %v513, %v513
        %v525 = vadd.f32 %v523, %v524
        %v526 = vrot.slane %v525, 4
        %v527 = vadd.f32 %v525, %v526
        %v528 = vrot.slane %v527, 2
        %v529 = vadd.f32 %v527, %v528
        %v530 = vrot.slane %v529, 1
        %v531 = vadd.f32 %v529, %v530
        %vm532 = vcmask 1040384
        %v533 = vsel %vm532, %v522, %v531
        %534 = vst [vmem:[%s255] sm:$0x3] %v533
        %s535 = sand.u32 %s142, 1
        %s536 = scalar_lea.sflag [#allocation3], %s535
        %s537 = sand.u32 %s142, 1
        %s538 = smul.addr %s537, 16
        %s539 = scalar_lea.vmem [#allocation2], %s538
        %s540 = sand.u32 %s168, 1
        %s541 = scalar_lea.sflag [#allocation5], %s540
        %s542 = sand.u32 %s168, 1
        %s543 = smul.addr %s542, 2
        %s544 = scalar_lea.vmem [#allocation4], %s543
        // Predicated region
        $region41: #{tpu_custom_call.1} parent=39 // pred_check
          %p545 = pneg %p152
        $region42: #{tpu_custom_call.1} parent=39 // pred_check_branch
          %547 = sbr.rel (%p545) target = $region44
        $region43: #{tpu_custom_call.1} parent=39 // pred_region
          %s548 = smul.u32 2, %s24
          %550 = vsyncadd %s536, 0
          %s551 = smul.addr %s548, 8
          %s552 = scalar_lea.hbm %s5, %s551
          %s553 = sshll.u32 %s539, 4
          %s554 = int_to_ptr.vmem [resolvable:$true] %s553
          %s555 = sshll.u32 %s552, 4
          %s556 = int_to_ptr.hbm [resolvable:$true] %s555
          %561 = dma.vmem_to_hbm [thread:$0]  %s554, 256, %s556, %s536, 128, 128, 8
        $region44: #{tpu_custom_call.1} parent=39 // pred_fallthru
          _
        // Predicated region
        $region45: #{tpu_custom_call.1} parent=39 // pred_check
          %p562 = pneg %p178
        $region46: #{tpu_custom_call.1} parent=39 // pred_check_branch
          %564 = sbr.rel (%p562) target = $region48
        $region47: #{tpu_custom_call.1} parent=39 // pred_region
          %566 = vsyncadd %s541, 0
          %s567 = smul.addr %s24, 2
          %s568 = scalar_lea.hbm %s6, %s567
          %s570 = sshll.u32 %s544, 4
          %s571 = int_to_ptr.vmem [resolvable:$true] %s570
          %s572 = sshll.u32 %s568, 4
          %s573 = int_to_ptr.hbm [resolvable:$true] %s572
          %575 = dma.vmem_to_hbm [thread:$0]  %s571, 32, %s573, %s541
        $region48: #{tpu_custom_call.1} parent=39 // pred_fallthru
          _
      $region40: #{tpu_custom_call.1} parent=5 // pred_fallthru
        _
      %p576 = scmp.le.s32.totalorder 2, %s19
      // Predicated region
      $region49: #{tpu_custom_call.1} parent=5 // pred_check
        %p577 = pneg %p576
      $region50: #{tpu_custom_call.1} parent=5 // pred_check_branch
        %579 = sbr.rel (%p577) target = $region52
      $region51: #{tpu_custom_call.1} parent=5 // pred_region
        %s580 = ssub.s32 %s19, 2
        // Predicated region
        $region53: #{tpu_custom_call.1} parent=51 // pred_check
          %p581 = pneg %p158
        $region54: #{tpu_custom_call.1} parent=51 // pred_check_branch
          %583 = sbr.rel (%p581) target = $region56
        $region55: #{tpu_custom_call.1} parent=51 // pred_region
          %s584 = sand.u32 %s143, 1
          %s585 = scalar_lea.sflag [#allocation3], %s584
          %s586 = sand.u32 %s143, 1
          %s587 = smul.addr %s586, 16
          %s588 = scalar_lea.vmem [#allocation2], %s587
          %590 = dma.done %s585, 256
        $region56: #{tpu_custom_call.1} parent=51 // pred_fallthru
          _
        // Predicated region
        $region57: #{tpu_custom_call.1} parent=51 // pred_check
          %p591 = pneg %p184
        $region58: #{tpu_custom_call.1} parent=51 // pred_check_branch
          %593 = sbr.rel (%p591) target = $region60
        $region59: #{tpu_custom_call.1} parent=51 // pred_region
          %s594 = sand.u32 %s169, 1
          %s595 = scalar_lea.sflag [#allocation5], %s594
          %s596 = sand.u32 %s169, 1
          %s597 = smul.addr %s596, 2
          %s598 = scalar_lea.vmem [#allocation4], %s597
          %600 = dma.done %s595, 32
        $region60: #{tpu_custom_call.1} parent=51 // pred_fallthru
          _
      $region52: #{tpu_custom_call.1} parent=5 // pred_fallthru
        _
    $region6: #{tpu_custom_call.1} parent=1 // loop_footer
      %s23 = sadd.s32 1, %s19
    $region7: #{tpu_custom_call.1} parent=1 // loop_footer_branch
      %18 = sbr.rel target = $region3
    $region8: #{tpu_custom_call.1} parent=1 // loop_exit
      _
    %601 = vsyncpa [#allocation3], 1
    %s602 = scalar_lea.sflag [#allocation3], 1
    %603 = vsyncpa %s602, 1
    %604 = vsyncpa [#allocation5], 1
    %s605 = scalar_lea.sflag [#allocation5], 1
    %606 = vsyncpa %s605, 1

</llo_original>
